<compile_context>
chip_gen: v6e
topology: v6e:2x2x1
jax: 0.10.0
libtpu: 0.0.40
codegen_flags: <defaults>
</compile_context>

<pallas_src>
import functools

import jax
import jax.numpy as jnp
from jax.experimental import pallas as pl
from jax.experimental.pallas import tpu as pltpu

LN_EPS = 1e-5
_MAX_ROW_TILE = 4096


# --------------------------------------------------------------------------
# Kernels
# --------------------------------------------------------------------------
def _layernorm_store(x_f32, gb_ref, o_ref):
    """LayerNorm over the last dim of x_f32 (f32), scale/shift from gb_ref.

    gb_ref is a resident (2, hidden) f32 block: row 0 = gamma, row 1 = beta.
    Two-pass mean/var is kept on purpose (numerically safe for poorly
    centered activations).
    """
    mean = jnp.mean(x_f32, axis=-1, keepdims=True)
    xc = x_f32 - mean
    var = jnp.mean(xc * xc, axis=-1, keepdims=True)
    inv = jax.lax.rsqrt(var + LN_EPS)
    y = xc * inv * gb_ref[0:1, :] + gb_ref[1:2, :]
    o_ref[...] = y.astype(o_ref.dtype)


def _add_norm_kernel(x1_ref, x2_ref, gb_ref, o_ref):
    # Add in the native input dtype (one upcast instead of two; for bf16 this
    # halves the VALU cast work and matches torch.add semantics).
    x = (x1_ref[...] + x2_ref[...]).astype(jnp.float32)
    _layernorm_store(x, gb_ref, o_ref)


def _add3_norm_kernel(x1_ref, x2_ref, x3_ref, gb_ref, o_ref):
    x = (x1_ref[...] + x2_ref[...] + x3_ref[...]).astype(jnp.float32)
    _layernorm_store(x, gb_ref, o_ref)


# --------------------------------------------------------------------------
# Tiling / VMEM sizing
# --------------------------------------------------------------------------
def _vmem_capacity_bytes():
    """Physical VMEM per TensorCore; conservative fallback if unavailable."""
    try:
        return int(pltpu.get_tpu_info().vmem_capacity_bytes)
    except Exception:
        return 64 << 20  # v7x-safe fallback


def _sublane_multiple(dtype):
    """Rows per packed sublane group: 8 for f32, 16 for bf16, 32 for int8."""
    itemsize = jnp.dtype(dtype).itemsize
    return max(8, 32 // itemsize)


def _auto_row_tile(rows, hidden, n_streams, dtype, capacity):
    """Pick a row tile whose double-buffered streamed blocks plus f32
    temporaries fit the generation's VMEM, with per-block bytes large enough
    to amortize the ~0.35 us/grid-step overhead."""
    itemsize = jnp.dtype(dtype).itemsize
    sub = _sublane_multiple(dtype)

    # Target block size per streamed array, by generation.
    if capacity >= (100 << 20):          # v5e / v6e: 128 MiB VMEM
        target_block = 12 << 20
    else:                                # v7x: 64 MiB VMEM per TC
        target_block = (8 << 20) if n_streams <= 3 else (6 << 20)

    # Per-tile-row VMEM: double-buffered I/O streams + ~3 f32 temporaries
    # (x, xc, y) the elementwise chain can materialize.
    per_row = n_streams * 2 * hidden * itemsize + 3 * hidden * 4
    budget = int(capacity * 0.70)
    max_rows_vmem = max(sub, budget // per_row)

    target_rows = max(sub, target_block // max(1, hidden * itemsize))
    rt = min(target_rows, max_rows_vmem, _MAX_ROW_TILE)
    rt = max(sub, (rt // sub) * sub)     # sublane-aligned

    # Never bigger than the (sublane-aligned) row count.
    rows_aligned = pl.cdiv(rows, sub) * sub
    rt = min(rt, rows_aligned)
    rt = max(sub, (rt // sub) * sub)

    # Keep >= 2 grid steps whenever rows allow it so the "parallel" row axis
    # shards across v7x's two TensorCores (no-op on single-TC v5e/v6e).
    if rows_aligned >= 2 * sub:
        while pl.cdiv(rows, rt) < 2 and rt > sub:
            rt = max(sub, ((rt // 2) // sub) * sub)
    return int(rt)


def _vmem_limit(row_tile, hidden, n_streams, dtype, capacity):
    """Scoped-VMEM limit: double-buffered blocks + 3x f32 working set with
    ~20% headroom, capped well under physical VMEM (48 MiB on v7x,
    96 MiB on v5e/v6e) to leave room for Mosaic internal scratch."""
    itemsize = jnp.dtype(dtype).itemsize
    block_bytes = row_tile * hidden * itemsize
    buffered = n_streams * 2 * block_bytes
    f32_work = 3 * row_tile * hidden * 4
    limit = int((buffered + f32_work) * 1.2) + (2 << 20)
    cap = min(int(capacity * 0.75), 100 << 20)
    return int(max(16 << 20, min(limit, cap)))


# --------------------------------------------------------------------------
# pallas_call wrapper
# --------------------------------------------------------------------------
@functools.partial(jax.jit, static_argnames=("row_tile", "vmem_limit"))
def _add_and_norm_2d(x1, x2, x3, gb, *, row_tile, vmem_limit):
    """Flattened (rows, hidden) add + layernorm via pallas_call.
    rows need NOT divide row_tile: the last block is ragged (reads padded,
    writes masked by Pallas)."""
    rows, hidden = x1.shape

    # TODO(synk): when hidden < 128 the output stores are masked partial vst;
    # a lane-dense folding of row-groups into the last dim would help, but it
    # only matters for toy hidden sizes.
    row_spec = pl.BlockSpec((row_tile, hidden), lambda i: (i, 0))
    par_spec = pl.BlockSpec((2, hidden), lambda i: (0, 0))  # resident gamma/beta

    if x3 is None:
        kernel = _add_norm_kernel
        inputs = (x1, x2, gb)
        in_specs = [row_spec, row_spec, par_spec]
    else:
        kernel = _add3_norm_kernel
        inputs = (x1, x2, x3, gb)
        in_specs = [row_spec, row_spec, row_spec, par_spec]

    return pl.pallas_call(
        kernel,
        out_shape=jax.ShapeDtypeStruct((rows, hidden), x1.dtype),
        grid_spec=pltpu.PrefetchScalarGridSpec(
            num_scalar_prefetch=0,
            grid=(pl.cdiv(rows, row_tile),),
            in_specs=in_specs,
            out_specs=row_spec,
        ),
        compiler_params=pltpu.CompilerParams(
            dimension_semantics=("parallel",),
            vmem_limit_bytes=vmem_limit,
        ),
    )(*inputs)


def add_and_norm(x1, x2, x3=None, *, gamma, beta, row_tile=None):
    """Matches AddAndNorm.forward: LayerNorm(x1 + x2 (+ x3)) over last dim."""
    orig_shape = x1.shape
    hidden = orig_shape[-1]

    # Promote mixed-dtype inputs to one common dtype so tile/VMEM accounting
    # (and the in-kernel native-dtype add) is consistent.
    if x3 is None:
        dtype = jnp.result_type(x1.dtype, x2.dtype)
    else:
        dtype = jnp.result_type(x1.dtype, x2.dtype, x3.dtype)

    x1f = x1.reshape(-1, hidden).astype(dtype)
    x2f = x2.reshape(-1, hidden).astype(dtype)
    x3f = None if x3 is None else x3.reshape(-1, hidden).astype(dtype)
    rows = x1f.shape[0]

    # Streamed arrays: inputs + output (gamma/beta are tiny and resident).
    n_streams = 3 if x3 is None else 4
    capacity = _vmem_capacity_bytes()
    if row_tile is None:
        row_tile = _auto_row_tile(rows, hidden, n_streams, dtype, capacity)

    # gamma/beta packed into one resident (2, hidden) f32 block.
    gb = jnp.stack([gamma.astype(jnp.float32).reshape(hidden),
                    beta.astype(jnp.float32).reshape(hidden)], axis=0)

    vmem_limit = _vmem_limit(row_tile, hidden, n_streams, dtype, capacity)
    out = _add_and_norm_2d(x1f, x2f, x3f, gb,
                           row_tile=row_tile, vmem_limit=vmem_limit)
    return out.reshape(orig_shape)


# --------------------------------------------------------------------------
# Self-test
# --------------------------------------------------------------------------
if __name__ == "__main__":
    batch, seq, hidden = 2, 8, 32

    key = jax.random.PRNGKey(0)
    k1, k2, k3 = jax.random.split(key, 3)
    x1 = jax.random.normal(k1, (batch, seq, hidden), dtype=jnp.float32)
    x2 = jax.random.normal(k2, (batch, seq, hidden), dtype=jnp.float32)
    x3 = jax.random.normal(k3, (batch, seq, hidden), dtype=jnp.float32)

    # nn.LayerNorm default init: weight = ones, bias = zeros (deterministic).
    gamma = jnp.ones((hidden,), dtype=jnp.float32)
    beta = jnp.zeros((hidden,), dtype=jnp.float32)

    def ref_ln(x):
        m = jnp.mean(x, axis=-1, keepdims=True)
        v = jnp.mean((x - m) ** 2, axis=-1, keepdims=True)
        return (x - m) / jnp.sqrt(v + LN_EPS) * gamma + beta

    # Two-input path.
    out2 = jax.block_until_ready(add_and_norm(x1, x2, gamma=gamma, beta=beta))
    assert jnp.allclose(out2, ref_ln(x1 + x2), atol=1e-5, rtol=1e-5)

    # Three-input path.
    out3 = jax.block_until_ready(add_and_norm(x1, x2, x3, gamma=gamma, beta=beta))
    assert jnp.allclose(out3, ref_ln(x1 + x2 + x3), atol=1e-5, rtol=1e-5)

    # Ragged-rows path (rows = 15 -> ragged final block, masked writes).
    y1 = jax.random.normal(k1, (3, 5, hidden), dtype=jnp.float32)
    y2 = jax.random.normal(k2, (3, 5, hidden), dtype=jnp.float32)
    outp = jax.block_until_ready(add_and_norm(y1, y2, gamma=gamma, beta=beta))
    assert jnp.allclose(outp, ref_ln(y1 + y2), atol=1e-5, rtol=1e-5)

    # bf16 path (native-dtype add, f32 stats); loose tolerance for bf16 I/O.
    b1 = x1.astype(jnp.bfloat16)
    b2 = x2.astype(jnp.bfloat16)
    outb = jax.block_until_ready(add_and_norm(b1, b2, gamma=gamma, beta=beta))
    refb = ref_ln((b1 + b2).astype(jnp.float32))
    assert jnp.allclose(outb.astype(jnp.float32), refb, atol=1e-1, rtol=1e-1)

    print("KERNEL_OK")
</pallas_src>

<mosaic_0001>
module attributes {stable_mosaic.version = 11 : i64} {
  func.func @_add_norm_kernel(%arg0: i32, %arg1: memref<8x32xf32, #tpu.memory_space<vmem>>, %arg2: memref<8x32xf32, #tpu.memory_space<vmem>>, %arg3: memref<2x32xf32, #tpu.memory_space<vmem>>, %arg4: memref<8x32xf32, #tpu.memory_space<vmem>>) attributes {dimension_semantics = [#tpu.dimension_semantics<parallel>], iteration_bounds = array<i64: 2>, scalar_prefetch = 0 : i64, scratch_operands = 0 : i64, tpu.core_type = #tpu.core_type<tc>, window_params = [{transform_indices = @transform_0, window_bounds = array<i64: 8, 32>}, {transform_indices = @transform_1, window_bounds = array<i64: 8, 32>}, {pipeline_mode = #tpu.pipeline_mode<synchronous>, transform_indices = @transform_2, window_bounds = array<i64: 2, 32>}, {transform_indices = @transform_3, window_bounds = array<i64: 8, 32>}]} {
    %c0 = arith.constant 0 : index
    %c0_0 = arith.constant 0 : index
    %0 = vector.load %arg1[%c0, %c0_0] : memref<8x32xf32, #tpu.memory_space<vmem>>, vector<8x32xf32>
    %c0_1 = arith.constant 0 : index
    %c0_2 = arith.constant 0 : index
    %1 = vector.load %arg2[%c0_1, %c0_2] : memref<8x32xf32, #tpu.memory_space<vmem>>, vector<8x32xf32>
    %2 = arith.addf %0, %1 : vector<8x32xf32>
    %cst = arith.constant dense<0.000000e+00> : vector<8xf32>
    %3 = vector.multi_reduction <add>, %2, %cst [1] : vector<8x32xf32> to vector<8xf32>
    %4 = vector.shape_cast %3 : vector<8xf32> to vector<8x1xf32>
    %cst_3 = arith.constant 3.200000e+01 : f32
    %5 = vector.broadcast %cst_3 : f32 to vector<8x1xf32>
    %6 = arith.divf %4, %5 : vector<8x1xf32>
    %7 = vector.broadcast %6 : vector<8x1xf32> to vector<8x32xf32>
    %8 = arith.subf %2, %7 : vector<8x32xf32>
    %9 = arith.mulf %8, %8 : vector<8x32xf32>
    %cst_4 = arith.constant dense<0.000000e+00> : vector<8xf32>
    %10 = vector.multi_reduction <add>, %9, %cst_4 [1] : vector<8x32xf32> to vector<8xf32>
    %11 = vector.shape_cast %10 : vector<8xf32> to vector<8x1xf32>
    %cst_5 = arith.constant 3.200000e+01 : f32
    %12 = vector.broadcast %cst_5 : f32 to vector<8x1xf32>
    %13 = arith.divf %11, %12 : vector<8x1xf32>
    %cst_6 = arith.constant 9.99999974E-6 : f32
    %14 = vector.broadcast %cst_6 : f32 to vector<8x1xf32>
    %15 = arith.addf %13, %14 : vector<8x1xf32>
    %16 = math.rsqrt %15 : vector<8x1xf32>
    %17 = vector.broadcast %16 : vector<8x1xf32> to vector<8x32xf32>
    %18 = arith.mulf %8, %17 : vector<8x32xf32>
    %c0_7 = arith.constant 0 : index
    %c0_8 = arith.constant 0 : index
    %19 = vector.load %arg3[%c0_7, %c0_8] : memref<2x32xf32, #tpu.memory_space<vmem>>, vector<1x32xf32>
    %20 = vector.broadcast %19 : vector<1x32xf32> to vector<8x32xf32>
    %21 = arith.mulf %18, %20 : vector<8x32xf32>
    %c1 = arith.constant 1 : index
    %c0_9 = arith.constant 0 : index
    %22 = vector.load %arg3[%c1, %c0_9] : memref<2x32xf32, #tpu.memory_space<vmem>>, vector<1x32xf32>
    %23 = vector.broadcast %22 : vector<1x32xf32> to vector<8x32xf32>
    %24 = arith.addf %21, %23 : vector<8x32xf32>
    %c0_10 = arith.constant 0 : index
    %c0_11 = arith.constant 0 : index
    %25 = vector.load %arg4[%c0_10, %c0_11] : memref<8x32xf32, #tpu.memory_space<vmem>>, vector<8x32xf32>
    tpu.vector_store %arg4[%c0_10, %c0_11], %24 {strides = array<i32>} : memref<8x32xf32, #tpu.memory_space<vmem>>, vector<8x32xf32>,
    return
  }
  func.func @transform_0(%arg0: i32) -> (i32, i32) {
    %c0_i32 = arith.constant 0 : i32
    %c0_i32_0 = arith.constant 0 : i32
    return %arg0, %c0_i32 : i32, i32
  }
  func.func @transform_1(%arg0: i32) -> (i32, i32) {
    %c0_i32 = arith.constant 0 : i32
    %c0_i32_0 = arith.constant 0 : i32
    return %arg0, %c0_i32 : i32, i32
  }
  func.func @transform_2(%arg0: i32) -> (i32, i32) {
    %c0_i32 = arith.constant 0 : i32
    %c0_i32_0 = arith.constant 0 : i32
    %c0_i32_1 = arith.constant 0 : i32
    return %c0_i32, %c0_i32_0 : i32, i32
  }
  func.func @transform_3(%arg0: i32) -> (i32, i32) {
    %c0_i32 = arith.constant 0 : i32
    %c0_i32_0 = arith.constant 0 : i32
    return %arg0, %c0_i32 : i32, i32
  }
}

</mosaic_0001>

<llo_original>
// kernel: _add_and_norm_2d.1
$region0: #{_add_and_norm_2d.1}
  #allocation0 [shape = 'u32[]', space=smem, size = 0x4, offset = 0x4, fixed_abs, tag = 'smem constant byte address 0x4 - core index']
  #allocation1 [shape = 'u32[144,128]{1,0:T(1,128)}', space=vmem, size = 0x12000, scoped, tag = 'internal scratch']
  %s0 = inlined_call_operand.hbm [shape: f32[16,32], index: 0, kind: input, shape index: {}]
  %s1 = inlined_call_operand.hbm [shape: f32[16,32], index: 1, kind: input, shape index: {}]
  %s2 = inlined_call_operand.vmem [shape: f32[2,32], index: 2, kind: input, shape index: {}]
  %s3 = inlined_call_operand.hbm [shape: f32[16,32], index: 3, kind: output, shape index: {}]
  %s4 = sld [smem:[#allocation0]]
  $region53: #{_add_and_norm_2d.1} parent=0
    _
  %s6 = ssub.s32 1, %s4
  %s7 = scalar_select 0, %s6, %s4
  $region1: #{_add_and_norm_2d.1} parent=0
    #allocation2 [shape = 'u8[8192]{0}', space=vmem, size = 0x2000, scoped, tag = 'input window, operand 0']
    #allocation3 [shape = 's32[2]{0}', space=sflag, size = 0x8, scoped, tag = 'scoped memory for _add_and_norm_2d.1']
    #allocation4 [shape = 's32[2]{0}', space=sflag, size = 0x8, scoped, tag = 'scoped memory for _add_and_norm_2d.1']
    #allocation5 [shape = 'u8[8192]{0}', space=vmem, size = 0x2000, scoped, tag = 'input window, operand 1']
    #allocation6 [shape = 's32[2]{0}', space=sflag, size = 0x8, scoped, tag = 'scoped memory for _add_and_norm_2d.1']
    #allocation7 [shape = 'u8[8192]{0}', space=vmem, size = 0x2000, scoped, tag = 'output window, operand 0']
    %8 = vsyncpa [#allocation3], 0
    %s9 = scalar_lea.sflag [#allocation3], 1
    %10 = vsyncpa %s9, 0
    %11 = vsyncpa [#allocation6], 0
    %s12 = scalar_lea.sflag [#allocation6], 1
    %13 = vsyncpa %s12, 0
    %14 = vsyncpa [#allocation4], 0
    %s15 = scalar_lea.sflag [#allocation4], 1
    %16 = vsyncpa %s15, 0
    loop: start=0, step=1, limit=4
    $region2: #{_add_and_norm_2d.1} parent=1 // loop_pre_header
      _
    $region3: #{_add_and_norm_2d.1} parent=1 // loop_header
      %s18 = sphi 0, %s22
      %p19 = scmp.ge.s32.totalorder %s18, 4
      %s28 = sphi 0, %s30
      %s31 = sphi 0, %s28
      %s32 = sphi 0, %s31
      %s48 = sphi 0, %s32
      %s54 = sphi 0, %s56
      %s57 = sphi 0, %s54
      %s58 = sphi 0, %s57
      %s74 = sphi 0, %s58
      %s78 = sphi 0, %s78
      %s80 = sphi 0, %s78
      %s81 = sphi 0, %s80
      %s95 = sphi 0, %s81
      %s101 = sphi 0, %s103
      %s104 = sphi 0, %s101
      %s105 = sphi 0, %s104
      %s121 = sphi 0, %s105
    $region4: #{_add_and_norm_2d.1} parent=1 // loop_header_branch
      %21 = sbr.rel (%p19) target = $region8
    $region5: #{_add_and_norm_2d.1} parent=1 // loop_body
      %s23 = ssub.s32 %s18, 1
      %s24 = ssub.s32 %s18, 2
      %s25 = sadd.s32 %s18, 1
      %s26 = ssub.s32 %s18, %s25
      %p27 = scmp.eq.s32.totalorder %s26, 0
      %s29 = sadd.s32 %s28, 1
      %s30 = scalar_select %p27, %s28, %s29
      %p33 = pneg %p27
      %p34 = scmp.eq.s32.totalorder %s18, 1
      %p35 = por %p33, %p34
      %p36 = scmp.ne.s32.totalorder %s28, %s31
      %p37 = scmp.eq.s32.totalorder %s18, 0
      %p38 = por %p36, %p37
      %p39 = scmp.ne.s32.totalorder %s28, %s31
      %p40 = scmp.eq.s32.totalorder %s23, 1
      %p41 = por %p39, %p40
      %p42 = scmp.ne.s32.totalorder %s31, %s32
      %p43 = scmp.eq.s32.totalorder %s23, 0
      %p44 = por %p42, %p43
      %p45 = scmp.ne.s32.totalorder %s31, %s32
      %p46 = scmp.eq.s32.totalorder %s24, 1
      %p47 = por %p45, %p46
      %p49 = scmp.ne.s32.totalorder %s32, %s48
      %p50 = scmp.eq.s32.totalorder %s24, 0
      %p51 = por %p49, %p50
      %s52 = ssub.s32 %s18, %s25
      %p53 = scmp.eq.s32.totalorder %s52, 0
      %s55 = sadd.s32 %s54, 1
      %s56 = scalar_select %p53, %s54, %s55
      %p59 = pneg %p53
      %p60 = scmp.eq.s32.totalorder %s18, 1
      %p61 = por %p59, %p60
      %p62 = scmp.ne.s32.totalorder %s54, %s57
      %p63 = scmp.eq.s32.totalorder %s18, 0
      %p64 = por %p62, %p63
      %p65 = scmp.ne.s32.totalorder %s54, %s57
      %p66 = scmp.eq.s32.totalorder %s23, 1
      %p67 = por %p65, %p66
      %p68 = scmp.ne.s32.totalorder %s57, %s58
      %p69 = scmp.eq.s32.totalorder %s23, 0
      %p70 = por %p68, %p69
      %p71 = scmp.ne.s32.totalorder %s57, %s58
      %p72 = scmp.eq.s32.totalorder %s24, 1
      %p73 = por %p71, %p72
      %p75 = scmp.ne.s32.totalorder %s58, %s74
      %p76 = scmp.eq.s32.totalorder %s24, 0
      %p77 = por %p75, %p76
      %s79 = sadd.s32 %s78, 1
      %p82 = scmp.eq.s32.totalorder %s18, 1
      %p83 = scmp.ne.s32.totalorder %s78, %s80
      %p84 = scmp.eq.s32.totalorder %s18, 0
      %p85 = por %p83, %p84
      %p86 = scmp.ne.s32.totalorder %s78, %s80
      %p87 = scmp.eq.s32.totalorder %s23, 1
      %p88 = por %p86, %p87
      %p89 = scmp.ne.s32.totalorder %s80, %s81
      %p90 = scmp.eq.s32.totalorder %s23, 0
      %p91 = por %p89, %p90
      %p92 = scmp.ne.s32.totalorder %s80, %s81
      %p93 = scmp.eq.s32.totalorder %s24, 1
      %p94 = por %p92, %p93
      %p96 = scmp.ne.s32.totalorder %s81, %s95
      %p97 = scmp.eq.s32.totalorder %s24, 0
      %p98 = por %p96, %p97
      %s99 = ssub.s32 %s18, %s25
      %p100 = scmp.eq.s32.totalorder %s99, 0
      %s102 = sadd.s32 %s101, 1
      %s103 = scalar_select %p100, %s101, %s102
      %p106 = pneg %p100
      %p107 = scmp.eq.s32.totalorder %s18, 1
      %p108 = por %p106, %p107
      %p109 = scmp.ne.s32.totalorder %s101, %s104
      %p110 = scmp.eq.s32.totalorder %s18, 0
      %p111 = por %p109, %p110
      %p112 = scmp.ne.s32.totalorder %s101, %s104
      %p113 = scmp.eq.s32.totalorder %s23, 1
      %p114 = por %p112, %p113
      %p115 = scmp.ne.s32.totalorder %s104, %s105
      %p116 = scmp.eq.s32.totalorder %s23, 0
      %p117 = por %p115, %p116
      %p118 = scmp.ne.s32.totalorder %s104, %s105
      %p119 = scmp.eq.s32.totalorder %s24, 1
      %p120 = por %p118, %p119
      %p122 = scmp.ne.s32.totalorder %s105, %s121
      %p123 = scmp.eq.s32.totalorder %s24, 0
      %p124 = por %p122, %p123
      %p125 = scmp.le.s32.totalorder 1, %s18
      %p126 = scmp.lt.s32.totalorder %s18, 3
      %p127 = pnand %p125, %p126
      %p128 = pneg %p127
      // Predicated region
      $region9: #{_add_and_norm_2d.1} parent=5 // pred_check
        _
      $region10: #{_add_and_norm_2d.1} parent=5 // pred_check_branch
        %130 = sbr.rel (%p127) target = $region12
      $region11: #{_add_and_norm_2d.1} parent=5 // pred_region
        %s131 = ssub.s32 %s18, 1
        // Predicated region
        $region13: #{_add_and_norm_2d.1} parent=11 // pred_check
          %p132 = pneg %p91
        $region14: #{_add_and_norm_2d.1} parent=11 // pred_check_branch
          %134 = sbr.rel (%p132) target = $region16
        $region15: #{_add_and_norm_2d.1} parent=11 // pred_region
          _
        $region16: #{_add_and_norm_2d.1} parent=11 // pred_fallthru
          _
      $region12: #{_add_and_norm_2d.1} parent=5 // pred_fallthru
        _
      %p135 = scmp.lt.s32.totalorder %s18, 2
      // Predicated region
      $region17: #{_add_and_norm_2d.1} parent=5 // pred_check
        %p136 = pneg %p135
      $region18: #{_add_and_norm_2d.1} parent=5 // pred_check_branch
        %138 = sbr.rel (%p136) target = $region20
      $region19: #{_add_and_norm_2d.1} parent=5 // pred_region
        // Predicated region
        $region21: #{_add_and_norm_2d.1} parent=19 // pred_check
          %p139 = pneg %p38
        $region22: #{_add_and_norm_2d.1} parent=19 // pred_check_branch
          %141 = sbr.rel (%p139) target = $region24
        $region23: #{_add_and_norm_2d.1} parent=19 // pred_region
          %s142 = sand.u32 %s28, 1
          %s143 = scalar_lea.sflag [#allocation3], %s142
          %s144 = sand.u32 %s28, 1
          %s145 = smul.addr %s144, 8
          %s146 = scalar_lea.vmem [#allocation2], %s145
          %s148 = ssub.s32 128, 128
          %149 = vsyncadd %s143, %s148
          %s150 = smul.addr %s18, 128
          %s151 = scalar_lea.hbm %s0, %s150
          %s153 = sshll.u32 %s146, 4
          %s154 = int_to_ptr.vmem [resolvable:$true] %s153
          %156 = dma.hbm_to_vmem [thread:$0]  %s151, 128, %s154, %s143
        $region24: #{_add_and_norm_2d.1} parent=19 // pred_fallthru
          _
        // Predicated region
        $region25: #{_add_and_norm_2d.1} parent=19 // pred_check
          %p157 = pneg %p64
        $region26: #{_add_and_norm_2d.1} parent=19 // pred_check_branch
          %159 = sbr.rel (%p157) target = $region28
        $region27: #{_add_and_norm_2d.1} parent=19 // pred_region
          %s160 = sand.u32 %s54, 1
          %s161 = scalar_lea.sflag [#allocation6], %s160
          %s162 = sand.u32 %s54, 1
          %s163 = smul.addr %s162, 8
          %s164 = scalar_lea.vmem [#allocation5], %s163
          %s166 = ssub.s32 128, 128
          %167 = vsyncadd %s161, %s166
          %s168 = smul.addr %s18, 128
          %s169 = scalar_lea.hbm %s1, %s168
          %s171 = sshll.u32 %s164, 4
          %s172 = int_to_ptr.vmem [resolvable:$true] %s171
          %174 = dma.hbm_to_vmem [thread:$0]  %s169, 128, %s172, %s161
        $region28: #{_add_and_norm_2d.1} parent=19 // pred_fallthru
          _
      $region20: #{_add_and_norm_2d.1} parent=5 // pred_fallthru
        _
      %p175 = scmp.le.s32.totalorder 1, %s18
      %p176 = scmp.lt.s32.totalorder %s18, 3
      %p177 = pnand %p175, %p176
      %p178 = pneg %p177
      // Predicated region
      $region29: #{_add_and_norm_2d.1} parent=5 // pred_check
        _
      $region30: #{_add_and_norm_2d.1} parent=5 // pred_check_branch
        %180 = sbr.rel (%p177) target = $region32
      $region31: #{_add_and_norm_2d.1} parent=5 // pred_region
        %s181 = ssub.s32 %s18, 1
        %s182 = sand.u32 %s31, 1
        %s183 = scalar_lea.sflag [#allocation3], %s182
        %s184 = sand.u32 %s31, 1
        %s185 = smul.addr %s184, 8
        %s186 = scalar_lea.vmem [#allocation2], %s185
        // Predicated region
        $region33: #{_add_and_norm_2d.1} parent=31 // pred_check
          %p187 = pneg %p44
        $region34: #{_add_and_norm_2d.1} parent=31 // pred_check_branch
          %189 = sbr.rel (%p187) target = $region36
        $region35: #{_add_and_norm_2d.1} parent=31 // pred_region
          %190 = dma.done %s183, 128
        $region36: #{_add_and_norm_2d.1} parent=31 // pred_fallthru
          _
        %s191 = sand.u32 %s57, 1
        %s192 = scalar_lea.sflag [#allocation6], %s191
        %s193 = sand.u32 %s57, 1
        %s194 = smul.addr %s193, 8
        %s195 = scalar_lea.vmem [#allocation5], %s194
        // Predicated region
        $region37: #{_add_and_norm_2d.1} parent=31 // pred_check
          %p196 = pneg %p70
        $region38: #{_add_and_norm_2d.1} parent=31 // pred_check_branch
          %198 = sbr.rel (%p196) target = $region40
        $region39: #{_add_and_norm_2d.1} parent=31 // pred_region
          %199 = dma.done %s192, 128
        $region40: #{_add_and_norm_2d.1} parent=31 // pred_fallthru
          _
        %s200 = sand.u32 %s31, 1
        %s201 = scalar_lea.sflag [#allocation3], %s200
        %s202 = sand.u32 %s31, 1
        %s203 = smul.addr %s202, 8
        %s204 = scalar_lea.vmem [#allocation2], %s203
        %p205 = pneg %p44
        %p206 = pneg %p41
        %s207 = sand.u32 %s57, 1
        %s208 = scalar_lea.sflag [#allocation6], %s207
        %s209 = sand.u32 %s57, 1
        %s210 = smul.addr %s209, 8
        %s211 = scalar_lea.vmem [#allocation5], %s210
        %p212 = pneg %p70
        %p213 = pneg %p67
        %p214 = pneg %p91
        %p215 = pneg %p88
        %p216 = pneg %p117
        %p217 = pneg %p114
        %s218 = sand.u32 %s104, 1
        %s219 = scalar_lea.sflag [#allocation4], %s218
        %s220 = sand.u32 %s104, 1
        %s221 = smul.addr %s220, 8
        %s222 = scalar_lea.vmem [#allocation7], %s221
        %v223 = vld [vmem:[%s186] sm:$0xff]
        %v224 = vld [vmem:[%s195] sm:$0xff]
        %v225 = vadd.f32 %v223, %v224
        %vm226 = vcmask 261120
        %v227 = vsel %vm226, %v225, 0.0
        %228 = vadd.xlane.f32.xlu0 %v227
        %v229 = vpop.xlane.xlu0 %228
        %v230 = vrcp.pop 32.0
        %v231 = vmul.f32 %v229, %v230
        %v232 = vsub.f32 %v225, %v231
        %v233 = vmul.f32 %v232, %v232
        %v234 = vsel %vm226, %v233, 0.0
        %235 = vadd.xlane.f32.xlu0 %v234
        %v236 = vpop.xlane.xlu0 %235
        %v237 = vmul.f32 %v236, %v230
        %v238 = vadd.f32 %v237, 1e-05
        %v239 = vrsqrt.pop %v238
        %v240 = vmul.f32 %v232, %v239
        %v241 = vld [vmem:[%s2] sm:$0x1]
        %v242 = vlaneseq
        %v243 = vshrl.u32 %v242, 7
        %v244 = vsub.s32 0, %v243
        %v245 = vrot.slane %v241, %v244
        %v246 = vmul.f32 %v240, %v245
        %v247 = vld [vmem:[%s2 + $0x1] sm:$0x1]
        %v248 = vlaneseq
        %v249 = vshrl.u32 %v248, 7
        %v250 = vsub.s32 0, %v249
        %v251 = vrot.slane %v247, %v250
        %v252 = vadd.f32 %v246, %v251
        %253 = vst.msk [vmem:[%s222] sm:$0xff] %vm226, %v252
        %s254 = sand.u32 %s104, 1
        %s255 = scalar_lea.sflag [#allocation4], %s254
        %s256 = sand.u32 %s104, 1
        %s257 = smul.addr %s256, 8
        %s258 = scalar_lea.vmem [#allocation7], %s257
        // Predicated region
        $region41: #{_add_and_norm_2d.1} parent=31 // pred_check
          %p259 = pneg %p114
        $region42: #{_add_and_norm_2d.1} parent=31 // pred_check_branch
          %261 = sbr.rel (%p259) target = $region44
        $region43: #{_add_and_norm_2d.1} parent=31 // pred_region
          %s263 = ssub.s32 128, 128
          %264 = vsyncadd %s255, %s263
          %s265 = smul.addr %s23, 128
          %s266 = scalar_lea.hbm %s3, %s265
          %s268 = sshll.u32 %s258, 4
          %s269 = int_to_ptr.vmem [resolvable:$true] %s268
          %271 = dma.vmem_to_hbm [thread:$0]  %s269, 128, %s266, %s255
        $region44: #{_add_and_norm_2d.1} parent=31 // pred_fallthru
          _
      $region32: #{_add_and_norm_2d.1} parent=5 // pred_fallthru
        _
      %p272 = scmp.le.s32.totalorder 2, %s18
      // Predicated region
      $region45: #{_add_and_norm_2d.1} parent=5 // pred_check
        %p273 = pneg %p272
      $region46: #{_add_and_norm_2d.1} parent=5 // pred_check_branch
        %275 = sbr.rel (%p273) target = $region48
      $region47: #{_add_and_norm_2d.1} parent=5 // pred_region
        %s276 = ssub.s32 %s18, 2
        // Predicated region
        $region49: #{_add_and_norm_2d.1} parent=47 // pred_check
          %p277 = pneg %p120
        $region50: #{_add_and_norm_2d.1} parent=47 // pred_check_branch
          %279 = sbr.rel (%p277) target = $region52
        $region51: #{_add_and_norm_2d.1} parent=47 // pred_region
          %s280 = sand.u32 %s105, 1
          %s281 = scalar_lea.sflag [#allocation4], %s280
          %s282 = sand.u32 %s105, 1
          %s283 = smul.addr %s282, 8
          %s284 = scalar_lea.vmem [#allocation7], %s283
          %285 = dma.done %s281, 128
        $region52: #{_add_and_norm_2d.1} parent=47 // pred_fallthru
          _
      $region48: #{_add_and_norm_2d.1} parent=5 // pred_fallthru
        _
    $region6: #{_add_and_norm_2d.1} parent=1 // loop_footer
      %s22 = sadd.s32 1, %s18
    $region7: #{_add_and_norm_2d.1} parent=1 // loop_footer_branch
      %17 = sbr.rel target = $region3
    $region8: #{_add_and_norm_2d.1} parent=1 // loop_exit
      _
    %286 = vsyncpa [#allocation3], 1
    %s287 = scalar_lea.sflag [#allocation3], 1
    %288 = vsyncpa %s287, 1
    %289 = vsyncpa [#allocation6], 1
    %s290 = scalar_lea.sflag [#allocation6], 1
    %291 = vsyncpa %s290, 1
    %292 = vsyncpa [#allocation4], 1
    %s293 = scalar_lea.sflag [#allocation4], 1
    %294 = vsyncpa %s293, 1

</llo_original>
